<compile_context>
chip_gen: v6e
topology: v6e:2x2x1
jax: 0.10.0
libtpu: 0.0.40
codegen_flags: <defaults>
</compile_context>

<pallas_src>
import jax
import jax.numpy as jnp
from jax.experimental import pallas as pl
from jax.experimental.pallas import tpu as pltpu


# ----------------------------------------------------------------------------
# Kernel body
# ----------------------------------------------------------------------------
def _fuse_kernel(w_ref, *refs):
    """Weighted sum of the input tiles.

    Args:
      w_ref: SMEM ref, shape (num_inputs,) float32 -- already softmax-normalized.
      refs:  (in_ref_0, ..., in_ref_{n-1}, out_ref), each a (tr, lanes) VMEM tile.
    """
    out_ref = refs[-1]
    in_refs = refs[:-1]
    # f32 multiply-accumulate chain.  NOTE (v5e): for sub-32-bit inputs these
    # astype() casts occupy real VALU slots (no bf16 VALU on v5e); with <=5
    # inputs the kernel remains HBM-bound, revisit with a bundle dump otherwise.
    acc = in_refs[0][...].astype(jnp.float32) * w_ref[0]
    for i in range(1, len(in_refs)):
        acc = acc + in_refs[i][...].astype(jnp.float32) * w_ref[i]
    out_ref[...] = acc.astype(out_ref.dtype)


# ----------------------------------------------------------------------------
# Hardware / layout / tiling helpers
# ----------------------------------------------------------------------------
def _vmem_capacity_bytes():
    """Per-core VMEM capacity; defaults to 128 MiB (v5e/v6e) if unavailable."""
    try:
        info = pltpu.get_tpu_info()
        cap = getattr(info, "vmem_capacity_bytes", None)
        if cap:
            return int(cap)
    except Exception:
        pass
    return 128 * 1024 * 1024


_LANE_CHOICES = (2048, 1536, 1024, 768, 512, 384, 256, 128)


def _choose_layout(total, sub):
    """Pick (rows, lanes) with lanes a multiple of 128.

    Prefers a lane width that divides the element count exactly (no padding)
    with a row count that is a multiple of the sublane packing `sub`.  If no
    multiple-of-128 lane width divides `total`, fall back to a narrow lane-dense
    slab; the caller pads the flattened data to rows*lanes.
    """
    best = None
    for lanes in _LANE_CHOICES:
        if total % lanes == 0:
            rows = total // lanes
            if rows % sub == 0:
                return rows, lanes
            if best is None:
                best = (rows, lanes)
    if best is not None:
        return best
    lanes = 256 if total >= 256 * sub else 128
    return -(-total // lanes), lanes  # ceil-div rows


def _pick_row_tile(rows_raw, sub, row_bytes, target_block_bytes,
                   max_block_bytes, min_steps, step_multiple):
    """Choose (tile_rows, steps).

    tile_rows is a multiple of `sub` unless a single full-extent block is used
    (always a legal block shape).  Guarantees >= min_steps grid steps for real
    problem sizes even if blocks drop below the ~512 KiB sweet spot, and rounds
    the step count up to `step_multiple` (v7x: 2 TensorCores).
    """
    total_bytes = rows_raw * row_bytes
    # Tiny problem: one full-extent block; per-step overhead would dominate.
    if rows_raw <= sub or total_bytes <= 256 * 1024:
        return rows_raw, 1
    tr_budget = max(sub, (max_block_bytes // row_bytes) // sub * sub)
    tr_target = max(sub, (target_block_bytes // row_bytes) // sub * sub)
    tr = min(tr_target, tr_budget)
    # Enforce a minimum number of grid steps (pipeline overlap + megacore).
    tr_steps_cap = max(sub, (rows_raw // min_steps) // sub * sub)
    tr = min(tr, tr_steps_cap)
    steps = -(-rows_raw // tr)
    if step_multiple > 1 and steps % step_multiple:
        steps += step_multiple - steps % step_multiple
    return tr, steps


# ----------------------------------------------------------------------------
# Wrapper
# ----------------------------------------------------------------------------
def fuse_op(inputs, weight, fuse_type="weighted"):
    """Pallas implementation of FuseOp.forward.

    inputs: list of arrays, each (N, C, H, W), same shape/dtype.
    weight: (num_inputs,) float32 parameter (used only if fuse_type=='weighted').
    """
    num_inputs = len(inputs)
    shape = inputs[0].shape
    dtype = inputs[0].dtype
    itemsize = jnp.dtype(dtype).itemsize
    total = 1
    for d in shape:
        total *= int(d)

    if fuse_type == "weighted":
        w = jax.nn.softmax(weight.astype(jnp.float32), axis=0)
    else:
        # Matches the PyTorch module: any non-'weighted' fuse_type is plain sum.
        w = jnp.ones((num_inputs,), jnp.float32)

    # Sublane packing granularity: 8 rows (32-bit), 16 (16-bit), 32 (8-bit).
    # max(1, ...) guards >32-bit dtypes (rare on TPU) against divide-by-zero.
    sub = 8 * max(1, 4 // itemsize)

    # --- generation-aware sizing ----------------------------------------------
    vmem_cap = _vmem_capacity_bytes()
    small_vmem = vmem_cap <= 64 * 1024 * 1024            # v7x-like: 64 MiB/TC, 2 TCs
    vmem_ceiling = min(48 * 1024 * 1024, vmem_cap // 2)   # 48 MiB (v5e/v6e), 32 MiB (v7x)
    target_block_bytes = max(1 << 20, min(4 << 20, vmem_cap // 64))  # ~2 MiB / ~1 MiB
    step_multiple = 2 if small_vmem else 1
    min_steps = 8

    # --- lane-dense 2-D layout -------------------------------------------------
    rows_raw, lanes = _choose_layout(total, sub)
    row_bytes = lanes * itemsize
    usable = int(vmem_ceiling * 0.8)
    max_block_bytes = max(row_bytes * sub, usable // (2 * (num_inputs + 1)))
    tr, steps = _pick_row_tile(rows_raw, sub, row_bytes, target_block_bytes,
                               max_block_bytes, min_steps, step_multiple)
    rows = tr * steps
    padded_total = rows * lanes

    if padded_total == total:
        flat = [x.reshape(rows, lanes) for x in inputs]
    else:
        pad = padded_total - total
        flat = [jnp.pad(x.reshape(-1), (0, pad)).reshape(rows, lanes)
                for x in inputs]

    # --- VMEM budget / buffering depth ------------------------------------------
    block_bytes = tr * row_bytes
    nbuf = 3 if (steps >= 8 and (3 * num_inputs + 2) * block_bytes <= usable) else 2
    vmem_needed = (nbuf * num_inputs + 2) * block_bytes
    vmem_limit = int(min(max(vmem_needed * 5 // 4, 16 * 1024 * 1024), vmem_ceiling))
    vmem_limit = max(vmem_limit, vmem_needed)  # never below what the blocks require

    pipeline_kwargs = {} if nbuf == 2 else {"pipeline_mode": pl.Buffered(nbuf)}

    # TODO(synk): the weight vector could ride as a scalar-prefetch operand via
    # PrefetchScalarGridSpec(num_scalar_prefetch=1); kept as an SMEM input for
    # robustness -- it is copied once, not per grid step.
    in_specs = [pl.BlockSpec(memory_space=pltpu.SMEM)]            # weights
    in_specs += [pl.BlockSpec((tr, lanes), lambda i: (i, 0), **pipeline_kwargs)
                 for _ in range(num_inputs)]
    out_spec = pl.BlockSpec((tr, lanes), lambda i: (i, 0))

    cost = pl.CostEstimate(
        flops=2 * num_inputs * padded_total,
        transcendentals=0,
        bytes_accessed=(num_inputs + 1) * padded_total * itemsize,
    )

    out = pl.pallas_call(
        _fuse_kernel,
        out_shape=jax.ShapeDtypeStruct((rows, lanes), dtype),
        grid=(steps,),
        in_specs=in_specs,
        out_specs=out_spec,
        compiler_params=pltpu.CompilerParams(
            dimension_semantics=("parallel",),
            vmem_limit_bytes=vmem_limit),
        cost_estimate=cost,
    )(w, *flat)

    if padded_total == total:
        return out.reshape(shape)
    return out.reshape(-1)[:total].reshape(shape)


# ----------------------------------------------------------------------------
# Pure-JAX reference (matches the PyTorch forward)
# ----------------------------------------------------------------------------
def fuse_op_ref(inputs, weight, fuse_type="weighted"):
    if fuse_type == "weighted":
        w = jax.nn.softmax(weight.astype(jnp.float32), axis=0)
        out = inputs[0] * w[0]
        for i in range(1, len(inputs)):
            out = out + inputs[i] * w[i]
        return out
    out = inputs[0]
    for x in inputs[1:]:
        out = out + x
    return out


if __name__ == "__main__":
    key = jax.random.PRNGKey(0)
    num_inputs = 3

    # Case 1: small NCHW inputs (power-of-two spatial).
    B, C, H, W = 2, 4, 16, 16
    keys = jax.random.split(key, num_inputs)
    inputs = [jax.random.normal(keys[i], (B, C, H, W), jnp.float32)
              for i in range(num_inputs)]
    # nn.Parameter(torch.ones(num_inputs)) -> deterministic ones init.
    weight = jnp.ones((num_inputs,), jnp.float32)

    out = jax.block_until_ready(fuse_op(inputs, weight, fuse_type="weighted"))
    ref = fuse_op_ref(inputs, weight, fuse_type="weighted")
    assert out.shape == (B, C, H, W)
    assert jnp.allclose(out, ref, atol=1e-5, rtol=1e-5), "mismatch vs reference (case 1)"

    # Case 2: BiFPN-like non-128 feature width (exercises the lane-dense repack).
    B2, C2, H2, W2 = 2, 4, 8, 20
    keys2 = jax.random.split(jax.random.PRNGKey(1), num_inputs)
    inputs2 = [jax.random.normal(keys2[i], (B2, C2, H2, W2), jnp.float32)
               for i in range(num_inputs)]
    out2 = jax.block_until_ready(fuse_op(inputs2, weight, fuse_type="weighted"))
    ref2 = fuse_op_ref(inputs2, weight, fuse_type="weighted")
    assert jnp.allclose(out2, ref2, atol=1e-5, rtol=1e-5), "mismatch vs reference (case 2)"

    # Case 3: awkward element count (exercises the pad-to-lane-dense path).
    B3, C3, H3, W3 = 1, 3, 7, 9
    keys3 = jax.random.split(jax.random.PRNGKey(2), num_inputs)
    inputs3 = [jax.random.normal(keys3[i], (B3, C3, H3, W3), jnp.float32)
               for i in range(num_inputs)]
    out3 = jax.block_until_ready(fuse_op(inputs3, weight, fuse_type="weighted"))
    ref3 = fuse_op_ref(inputs3, weight, fuse_type="weighted")
    assert jnp.allclose(out3, ref3, atol=1e-5, rtol=1e-5), "mismatch vs reference (case 3)"

    # Case 4: non-weighted (plain sum) path.
    out4 = jax.block_until_ready(fuse_op(inputs, weight, fuse_type="sum"))
    ref4 = fuse_op_ref(inputs, weight, fuse_type="sum")
    assert jnp.allclose(out4, ref4, atol=1e-5, rtol=1e-5), "mismatch vs reference (case 4)"

    print("KERNEL_OK")
</pallas_src>

<mosaic_0001>
module attributes {stable_mosaic.version = 11 : i64} {
  func.func @_fuse_kernel(%arg0: i32, %arg1: memref<3xf32, #tpu.memory_space<smem>>, %arg2: memref<8x256xf32, #tpu.memory_space<vmem>>, %arg3: memref<8x256xf32, #tpu.memory_space<vmem>>, %arg4: memref<8x256xf32, #tpu.memory_space<vmem>>, %arg5: memref<8x256xf32, #tpu.memory_space<vmem>>) attributes {dimension_semantics = [#tpu.dimension_semantics<parallel>], iteration_bounds = array<i64: 1>, scalar_prefetch = 0 : i64, scratch_operands = 0 : i64, tpu.core_type = #tpu.core_type<tc>, window_params = [{transform_indices = @transform_0, window_bounds = array<i64: 3>}, {transform_indices = @transform_1, window_bounds = array<i64: 8, 256>}, {transform_indices = @transform_2, window_bounds = array<i64: 8, 256>}, {transform_indices = @transform_3, window_bounds = array<i64: 8, 256>}, {transform_indices = @transform_4, window_bounds = array<i64: 8, 256>}]} {
    %c0 = arith.constant 0 : index
    %c0_0 = arith.constant 0 : index
    %0 = vector.load %arg2[%c0, %c0_0] : memref<8x256xf32, #tpu.memory_space<vmem>>, vector<8x256xf32>
    %c0_1 = arith.constant 0 : index
    %1 = memref.load %arg1[%c0_1] : memref<3xf32, #tpu.memory_space<smem>>
    %2 = vector.broadcast %1 : f32 to vector<8x256xf32>
    %3 = arith.mulf %0, %2 : vector<8x256xf32>
    %c0_2 = arith.constant 0 : index
    %c0_3 = arith.constant 0 : index
    %4 = vector.load %arg3[%c0_2, %c0_3] : memref<8x256xf32, #tpu.memory_space<vmem>>, vector<8x256xf32>
    %c1 = arith.constant 1 : index
    %5 = memref.load %arg1[%c1] : memref<3xf32, #tpu.memory_space<smem>>
    %6 = vector.broadcast %5 : f32 to vector<8x256xf32>
    %7 = arith.mulf %4, %6 : vector<8x256xf32>
    %8 = arith.addf %3, %7 : vector<8x256xf32>
    %c0_4 = arith.constant 0 : index
    %c0_5 = arith.constant 0 : index
    %9 = vector.load %arg4[%c0_4, %c0_5] : memref<8x256xf32, #tpu.memory_space<vmem>>, vector<8x256xf32>
    %c2 = arith.constant 2 : index
    %10 = memref.load %arg1[%c2] : memref<3xf32, #tpu.memory_space<smem>>
    %11 = vector.broadcast %10 : f32 to vector<8x256xf32>
    %12 = arith.mulf %9, %11 : vector<8x256xf32>
    %13 = arith.addf %8, %12 : vector<8x256xf32>
    %c0_6 = arith.constant 0 : index
    %c0_7 = arith.constant 0 : index
    %14 = vector.load %arg5[%c0_6, %c0_7] : memref<8x256xf32, #tpu.memory_space<vmem>>, vector<8x256xf32>
    tpu.vector_store %arg5[%c0_6, %c0_7], %13 {strides = array<i32>} : memref<8x256xf32, #tpu.memory_space<vmem>>, vector<8x256xf32>,
    return
  }
  func.func @transform_0(%arg0: i32) -> i32 {
    %c0_i32 = arith.constant 0 : i32
    %c0_i32_0 = arith.constant 0 : i32
    return %c0_i32 : i32
  }
  func.func @transform_1(%arg0: i32) -> (i32, i32) {
    %c0_i32 = arith.constant 0 : i32
    %c0_i32_0 = arith.constant 0 : i32
    return %arg0, %c0_i32 : i32, i32
  }
  func.func @transform_2(%arg0: i32) -> (i32, i32) {
    %c0_i32 = arith.constant 0 : i32
    %c0_i32_0 = arith.constant 0 : i32
    return %arg0, %c0_i32 : i32, i32
  }
  func.func @transform_3(%arg0: i32) -> (i32, i32) {
    %c0_i32 = arith.constant 0 : i32
    %c0_i32_0 = arith.constant 0 : i32
    return %arg0, %c0_i32 : i32, i32
  }
  func.func @transform_4(%arg0: i32) -> (i32, i32) {
    %c0_i32 = arith.constant 0 : i32
    %c0_i32_0 = arith.constant 0 : i32
    return %arg0, %c0_i32 : i32, i32
  }
}

</mosaic_0001>

<llo_original>
// kernel: tpu_custom_call.1
$region0: #{tpu_custom_call.1}
  #allocation0 [shape = 'u32[]', space=smem, size = 0x4, offset = 0x4, fixed_abs, tag = 'smem constant byte address 0x4 - core index']
  #allocation1 [shape = 'u32[144,128]{1,0:T(1,128)}', space=vmem, size = 0x12000, scoped, tag = 'internal scratch']
  %s0 = inlined_call_operand.hbm [shape: f32[3], index: 0, kind: input, shape index: {}]
  %s1 = inlined_call_operand.hbm [shape: f32[8,256], index: 1, kind: input, shape index: {}]
  %s2 = inlined_call_operand.hbm [shape: f32[8,256], index: 2, kind: input, shape index: {}]
  %s3 = inlined_call_operand.hbm [shape: f32[8,256], index: 3, kind: input, shape index: {}]
  %s4 = inlined_call_operand.hbm [shape: f32[8,256], index: 4, kind: output, shape index: {}]
  %s5 = sld [smem:[#allocation0]]
  $region42: #{tpu_custom_call.1} parent=0
    _
  %s7 = ssub.s32 1, %s5
  %s8 = scalar_select 0, %s7, %s5
  $region1: #{tpu_custom_call.1} parent=0
    #allocation2 [shape = 'u8[512]{0}', space=smem, size = 0x200, scoped, tag = 'input window, operand 0, single buffered']
    #allocation3 [shape = 's32[1]{0}', space=sflag, size = 0x4, scoped, tag = 'scoped memory for tpu_custom_call.1']
    #allocation4 [shape = 's32[1]{0}', space=sflag, size = 0x4, scoped, tag = 'scoped memory for tpu_custom_call.1']
    #allocation5 [shape = 's32[1]{0}', space=sflag, size = 0x4, scoped, tag = 'scoped memory for tpu_custom_call.1']
    #allocation6 [shape = 'u8[8192]{0}', space=vmem, size = 0x2000, scoped, tag = 'input window, operand 1, single buffered']
    #allocation7 [shape = 'u8[8192]{0}', space=vmem, size = 0x2000, scoped, tag = 'input window, operand 2, single buffered']
    #allocation8 [shape = 's32[1]{0}', space=sflag, size = 0x4, scoped, tag = 'scoped memory for tpu_custom_call.1']
    #allocation9 [shape = 'u8[8192]{0}', space=vmem, size = 0x2000, scoped, tag = 'input window, operand 3, single buffered']
    #allocation10 [shape = 'u8[8192]{0}', space=vmem, size = 0x2000, scoped, tag = 'output window, operand 0, single buffered']
    %9 = vsyncpa [#allocation5], 0
    %10 = vsyncpa [#allocation3], 0
    %11 = vsyncpa [#allocation8], 0
    %12 = vsyncpa [#allocation4], 0
    // Predicated region
    $region2: #{tpu_custom_call.1} parent=1 // pred_check
      _
    $region3: #{tpu_custom_call.1} parent=1 // pred_check_branch
      %14 = sbr.rel (0) target = $region5
    $region4: #{tpu_custom_call.1} parent=1 // pred_region
      %s16 = ssub.s32 16, 16
      %17 = vsyncadd [#allocation5], %s16
      %20 = dma.hbm_to_smem %s0, 16, [#allocation2], [#allocation5]
    $region5: #{tpu_custom_call.1} parent=1 // pred_fallthru
      _
    // Predicated region
    $region6: #{tpu_custom_call.1} parent=1 // pred_check
      _
    $region7: #{tpu_custom_call.1} parent=1 // pred_check_branch
      %22 = sbr.rel (0) target = $region9
    $region8: #{tpu_custom_call.1} parent=1 // pred_region
      %s24 = ssub.s32 256, 256
      %25 = vsyncadd [#allocation3], %s24
      %s27 = sshll.u32 [#allocation6], 4
      %s28 = int_to_ptr.vmem [resolvable:$true] %s27
      %30 = dma.hbm_to_vmem [thread:$0]  %s1, 256, %s28, [#allocation3]
    $region9: #{tpu_custom_call.1} parent=1 // pred_fallthru
      _
    // Predicated region
    $region10: #{tpu_custom_call.1} parent=1 // pred_check
      _
    $region11: #{tpu_custom_call.1} parent=1 // pred_check_branch
      %32 = sbr.rel (0) target = $region13
    $region12: #{tpu_custom_call.1} parent=1 // pred_region
      %s34 = ssub.s32 256, 256
      %35 = vsyncadd [#allocation8], %s34
      %s37 = sshll.u32 [#allocation7], 4
      %s38 = int_to_ptr.vmem [resolvable:$true] %s37
      %40 = dma.hbm_to_vmem [thread:$0]  %s2, 256, %s38, [#allocation8]
    $region13: #{tpu_custom_call.1} parent=1 // pred_fallthru
      _
    // Predicated region
    $region14: #{tpu_custom_call.1} parent=1 // pred_check
      _
    $region15: #{tpu_custom_call.1} parent=1 // pred_check_branch
      %42 = sbr.rel (0) target = $region17
    $region16: #{tpu_custom_call.1} parent=1 // pred_region
      %s44 = ssub.s32 256, 256
      %45 = vsyncadd [#allocation8], %s44
      %s47 = sshll.u32 [#allocation9], 4
      %s48 = int_to_ptr.vmem [resolvable:$true] %s47
      %50 = dma.hbm_to_vmem [thread:$0]  %s3, 256, %s48, [#allocation8]
    $region17: #{tpu_custom_call.1} parent=1 // pred_fallthru
      _
    // Predicated region
    $region18: #{tpu_custom_call.1} parent=1 // pred_check
      _
    $region19: #{tpu_custom_call.1} parent=1 // pred_check_branch
      %52 = sbr.rel (0) target = $region21
    $region20: #{tpu_custom_call.1} parent=1 // pred_region
      %53 = dma.done [#allocation5], 16
    $region21: #{tpu_custom_call.1} parent=1 // pred_fallthru
      _
    // Predicated region
    $region22: #{tpu_custom_call.1} parent=1 // pred_check
      _
    $region23: #{tpu_custom_call.1} parent=1 // pred_check_branch
      %55 = sbr.rel (0) target = $region25
    $region24: #{tpu_custom_call.1} parent=1 // pred_region
      %56 = dma.done [#allocation3], 256
    $region25: #{tpu_custom_call.1} parent=1 // pred_fallthru
      _
    // Predicated region
    $region26: #{tpu_custom_call.1} parent=1 // pred_check
      _
    $region27: #{tpu_custom_call.1} parent=1 // pred_check_branch
      %58 = sbr.rel (0) target = $region29
    $region28: #{tpu_custom_call.1} parent=1 // pred_region
      %59 = dma.done [#allocation8], 256
    $region29: #{tpu_custom_call.1} parent=1 // pred_fallthru
      _
    // Predicated region
    $region30: #{tpu_custom_call.1} parent=1 // pred_check
      _
    $region31: #{tpu_custom_call.1} parent=1 // pred_check_branch
      %61 = sbr.rel (0) target = $region33
    $region32: #{tpu_custom_call.1} parent=1 // pred_region
      %62 = dma.done [#allocation8], 256
    $region33: #{tpu_custom_call.1} parent=1 // pred_fallthru
      _
    %63 = sfence
    %v64 = vld [vmem:[#allocation6] sm:$0xff]
    %v65 = vld [vmem:[#allocation6 + $0x8] sm:$0xff]
    %s66 = sld [smem:[#allocation2]]
    %v67 = vstv %s66
    %v68 = vmul.f32 %v64, %v67
    %v69 = vmul.f32 %v65, %v67
    %v70 = vld [vmem:[#allocation7] sm:$0xff]
    %v71 = vld [vmem:[#allocation7 + $0x8] sm:$0xff]
    %s72 = sld [smem:[#allocation2 + $0x1]]
    %v73 = vstv %s72
    %v74 = vmul.f32 %v70, %v73
    %v75 = vmul.f32 %v71, %v73
    %v76 = vadd.f32 %v68, %v74
    %v77 = vadd.f32 %v69, %v75
    %v78 = vld [vmem:[#allocation9] sm:$0xff]
    %v79 = vld [vmem:[#allocation9 + $0x8] sm:$0xff]
    %s80 = sld [smem:[#allocation2 + $0x2]]
    %v81 = vstv %s80
    %v82 = vmul.f32 %v78, %v81
    %v83 = vmul.f32 %v79, %v81
    %v84 = vadd.f32 %v76, %v82
    %v85 = vadd.f32 %v77, %v83
    %86 = vst [vmem:[#allocation10] sm:$0xff] %v84
    %87 = vst [vmem:[#allocation10 + $0x8] sm:$0xff] %v85
    // Predicated region
    $region34: #{tpu_custom_call.1} parent=1 // pred_check
      _
    $region35: #{tpu_custom_call.1} parent=1 // pred_check_branch
      %89 = sbr.rel (0) target = $region37
    $region36: #{tpu_custom_call.1} parent=1 // pred_region
      %s91 = ssub.s32 256, 256
      %92 = vsyncadd [#allocation4], %s91
      %s94 = sshll.u32 [#allocation10], 4
      %s95 = int_to_ptr.vmem [resolvable:$true] %s94
      %97 = dma.vmem_to_hbm [thread:$0]  %s95, 256, %s4, [#allocation4]
    $region37: #{tpu_custom_call.1} parent=1 // pred_fallthru
      _
    // Predicated region
    $region38: #{tpu_custom_call.1} parent=1 // pred_check
      _
    $region39: #{tpu_custom_call.1} parent=1 // pred_check_branch
      %99 = sbr.rel (0) target = $region41
    $region40: #{tpu_custom_call.1} parent=1 // pred_region
      %100 = dma.done [#allocation4], 256
    $region41: #{tpu_custom_call.1} parent=1 // pred_fallthru
      _
    %101 = vsyncpa [#allocation3], 1
    %102 = vsyncpa [#allocation8], 1
    %103 = vsyncpa [#allocation4], 1
    %104 = vsyncpa [#allocation5], 1

</llo_original>
